<compile_context>
chip_gen: v6e
topology: v6e:2x2x1
jax: 0.10.0
libtpu: 0.0.40
codegen_flags: <defaults>
</compile_context>

<pallas_src>
import functools

import jax
import jax.numpy as jnp
from jax.experimental import pallas as pl
from jax.experimental.pallas import tpu as pltpu

NUM_CLASSES = 11
BACKBONE_FEATURES = 1000
HIDDEN = 256
OUT_PADDED = 128     # 11 -> 128 lanes so the output store is a dense vst


def _model_kernel(x_ref, wc_ref, bc_ref, w2_ref, b2_ref, out_ref, *, inv_hw):
    # x_ref: (TB, C, HW) tile, lane-dense spatial dim, any float dtype.
    # Global average pool with f32 accumulation (no full-tile f32 copy).
    gap = jnp.sum(x_ref[...], axis=-1, dtype=jnp.float32) * inv_hw      # (TB, C)

    # Folded backbone + first fc layer: (TB, C) @ (C, 256) on the MXU.
    h = jnp.dot(gap, wc_ref[...], preferred_element_type=jnp.float32) + bc_ref[...]
    h = jnp.maximum(h, 0.0)

    # Second fc layer: (TB, 256) @ (256, 128) on the MXU.
    logits = jnp.dot(h, w2_ref[...], preferred_element_type=jnp.float32) + b2_ref[...]

    out_ref[...] = logits.astype(out_ref.dtype)                          # dense (TB, 128)


def _pick_batch_tile(B, C, HW, itemsize):
    """~2 MB of x per buffer; multiple of 8; keep a few grid steps for large B."""
    target = 2 * 1024 * 1024
    row_bytes = max(1, C * HW * itemsize)
    tb = max(8, min(256, target // row_bytes))
    if B >= 32:
        tb = min(tb, max(8, B // 4))      # >=~4 grid steps -> megacore + pipelining
    tb = max(8, (tb // 8) * 8)
    if tb >= B:
        return int(B)                      # single exact block, no boundary padding
    return int(tb)


def model_forward(x, folded_params, *, batch_tile=None):
    """x: (B, C, H, W) float32 or bfloat16. Returns (B, 11) float32 logits."""
    B, C, H, W = x.shape
    wc, bc, w2, b2 = folded_params
    HW = H * W

    xf = x.reshape(B, C, HW)               # row-major reshape: no data movement

    itemsize = jnp.dtype(x.dtype).itemsize
    TB = batch_tile if batch_tile is not None else _pick_batch_tile(B, C, HW, itemsize)
    grid_b = pl.cdiv(B, TB)

    kernel = functools.partial(_model_kernel, inv_hw=1.0 / float(HW))

    # TODO(synk): for very large H*W a second "arbitrary" grid axis over the
    # spatial dim with a partial-sum accumulator would keep the x tile ~1-2 MB
    # on v7x's 64 MiB VMEM; not needed at these shapes.
    out = pl.pallas_call(
        kernel,
        out_shape=jax.ShapeDtypeStruct((B, OUT_PADDED), jnp.float32),
        grid=(grid_b,),
        in_specs=[
            # x: one batch tile per grid step (double-buffered by the pipeline)
            pl.BlockSpec((TB, C, HW), lambda b: (b, 0, 0)),
            # folded weights / biases: full blocks, constant index -> VMEM-resident
            pl.BlockSpec(wc.shape, lambda b: (0, 0)),
            pl.BlockSpec(bc.shape, lambda b: (0, 0)),
            pl.BlockSpec(w2.shape, lambda b: (0, 0)),
            pl.BlockSpec(b2.shape, lambda b: (0, 0)),
        ],
        out_specs=pl.BlockSpec((TB, OUT_PADDED), lambda b: (b, 0)),
        compiler_params=pltpu.CompilerParams(
            dimension_semantics=("parallel",),   # megacore sharding of the batch grid
        ),
    )(xf, wc, bc, w2, b2)

    return out[:, :NUM_CLASSES]


def init_params(key, in_channels):
    """Deterministic parameter init (Kaiming-uniform-ish, like nn.Linear)."""
    ks = jax.random.split(key, 6)

    def linear(kw, kb, fan_in, fan_out):
        bound = 1.0 / jnp.sqrt(jnp.float32(fan_in))
        w = jax.random.uniform(kw, (fan_in, fan_out), jnp.float32, -bound, bound)
        b = jax.random.uniform(kb, (1, fan_out), jnp.float32, -bound, bound)
        return w, b

    wbb, bbb = linear(ks[0], ks[1], in_channels, BACKBONE_FEATURES)
    w1, b1 = linear(ks[2], ks[3], BACKBONE_FEATURES, HIDDEN)
    w2, b2 = linear(ks[4], ks[5], HIDDEN, NUM_CLASSES)
    return (wbb, bbb, w1, b1, w2, b2)


def fold_params(params):
    """Fold backbone Linear(C,1000) into fc Linear(1000,256); pad 11->128 lanes."""
    wbb, bbb, w1, b1, w2, b2 = params
    hp = jax.lax.Precision.HIGHEST
    wc = jnp.dot(wbb, w1, precision=hp)                 # (C, 256)
    bc = jnp.dot(bbb, w1, precision=hp) + b1            # (1, 256)
    opad = OUT_PADDED - w2.shape[1]
    w2p = jnp.pad(w2, ((0, 0), (0, opad)))              # (256, 128)
    b2p = jnp.pad(b2, ((0, 0), (0, opad)))              # (1, 128)
    return (wc, bc, w2p, b2p)


def reference_forward(x, params):
    """Pure-JAX reference of the original (un-folded) forward pass."""
    wbb, bbb, w1, b1, w2, b2 = params
    hp = jax.lax.Precision.HIGHEST
    gap = jnp.mean(x.astype(jnp.float32), axis=(2, 3))
    feat = jnp.dot(gap, wbb, precision=hp) + bbb
    h = jnp.maximum(jnp.dot(feat, w1, precision=hp) + b1, 0.0)
    return jnp.dot(h, w2, precision=hp) + b2


if __name__ == "__main__":
    key = jax.random.PRNGKey(0)
    kx, kp = jax.random.split(key)

    B, C, H, W = 2, 4, 16, 16
    x = jax.random.normal(kx, (B, C, H, W), jnp.float32)
    params = init_params(kp, C)
    folded = fold_params(params)

    ref = reference_forward(x, params)

    # f32 input path
    out = jax.block_until_ready(model_forward(x, folded))
    assert out.shape == (B, NUM_CLASSES), out.shape
    assert jnp.allclose(out, ref, atol=5e-4, rtol=5e-4), (
        "f32 mismatch, max abs err = %g" % float(jnp.max(jnp.abs(out - ref))))

    # bf16 input path (half the HBM traffic for x; f32 accumulation in-kernel)
    out_bf16 = jax.block_until_ready(model_forward(x.astype(jnp.bfloat16), folded))
    assert jnp.allclose(out_bf16, ref, atol=1e-2, rtol=1e-2), (
        "bf16 mismatch, max abs err = %g" % float(jnp.max(jnp.abs(out_bf16 - ref))))

    print("KERNEL_OK")
</pallas_src>

<mosaic_0001>
module attributes {stable_mosaic.version = 11 : i64} {
  func.func @_model_kernel(%arg0: i32, %arg1: memref<2x4x256xf32, #tpu.memory_space<vmem>>, %arg2: memref<4x256xf32, #tpu.memory_space<vmem>>, %arg3: memref<1x256xf32, #tpu.memory_space<vmem>>, %arg4: memref<256x128xf32, #tpu.memory_space<vmem>>, %arg5: memref<1x128xf32, #tpu.memory_space<vmem>>, %arg6: memref<2x128xf32, #tpu.memory_space<vmem>>) attributes {dimension_semantics = [#tpu.dimension_semantics<parallel>], iteration_bounds = array<i64: 1>, scalar_prefetch = 0 : i64, scratch_operands = 0 : i64, tpu.core_type = #tpu.core_type<tc>, window_params = [{transform_indices = @transform_0, window_bounds = array<i64: 2, 4, 256>}, {pipeline_mode = #tpu.pipeline_mode<synchronous>, transform_indices = @transform_1, window_bounds = array<i64: 4, 256>}, {pipeline_mode = #tpu.pipeline_mode<synchronous>, transform_indices = @transform_2, window_bounds = array<i64: 1, 256>}, {pipeline_mode = #tpu.pipeline_mode<synchronous>, transform_indices = @transform_3, window_bounds = array<i64: 256, 128>}, {pipeline_mode = #tpu.pipeline_mode<synchronous>, transform_indices = @transform_4, window_bounds = array<i64: 1, 128>}, {transform_indices = @transform_5, window_bounds = array<i64: 2, 128>}]} {
    %c0 = arith.constant 0 : index
    %c0_0 = arith.constant 0 : index
    %c0_1 = arith.constant 0 : index
    %0 = vector.load %arg1[%c0, %c0_0, %c0_1] : memref<2x4x256xf32, #tpu.memory_space<vmem>>, vector<2x4x256xf32>
    %cst = arith.constant dense<0.000000e+00> : vector<2x4xf32>
    %1 = vector.multi_reduction <add>, %0, %cst [2] : vector<2x4x256xf32> to vector<2x4xf32>
    %cst_2 = arith.constant 3.906250e-03 : f32
    %2 = vector.broadcast %cst_2 : f32 to vector<2x4xf32>
    %3 = arith.mulf %1, %2 : vector<2x4xf32>
    %c0_3 = arith.constant 0 : index
    %c0_4 = arith.constant 0 : index
    %4 = vector.load %arg2[%c0_3, %c0_4] : memref<4x256xf32, #tpu.memory_space<vmem>>, vector<4x256xf32>
    %cst_5 = arith.constant dense<0.000000e+00> : vector<2x256xf32>
    %5 = tpu.matmul %3, %4, %cst_5 {dimension_numbers = #tpu.dot_dimension_numbers<[1], [0], [0], [1], [0, 0, 1, 1], [], []>} : vector<2x4xf32>, vector<4x256xf32>, vector<2x256xf32> -> vector<2x256xf32>
    %c0_6 = arith.constant 0 : index
    %c0_7 = arith.constant 0 : index
    %6 = vector.load %arg3[%c0_6, %c0_7] : memref<1x256xf32, #tpu.memory_space<vmem>>, vector<1x256xf32>
    %7 = vector.broadcast %6 : vector<1x256xf32> to vector<2x256xf32>
    %8 = arith.addf %5, %7 : vector<2x256xf32>
    %cst_8 = arith.constant 0.000000e+00 : f32
    %9 = vector.broadcast %cst_8 : f32 to vector<2x256xf32>
    %10 = arith.maximumf %8, %9 : vector<2x256xf32>
    %c0_9 = arith.constant 0 : index
    %c0_10 = arith.constant 0 : index
    %11 = vector.load %arg4[%c0_9, %c0_10] : memref<256x128xf32, #tpu.memory_space<vmem>>, vector<256x128xf32>
    %cst_11 = arith.constant dense<0.000000e+00> : vector<2x128xf32>
    %12 = tpu.matmul %10, %11, %cst_11 {dimension_numbers = #tpu.dot_dimension_numbers<[1], [0], [0], [1], [0, 0, 1, 1], [], []>} : vector<2x256xf32>, vector<256x128xf32>, vector<2x128xf32> -> vector<2x128xf32>
    %c0_12 = arith.constant 0 : index
    %c0_13 = arith.constant 0 : index
    %13 = vector.load %arg5[%c0_12, %c0_13] : memref<1x128xf32, #tpu.memory_space<vmem>>, vector<1x128xf32>
    %14 = vector.broadcast %13 : vector<1x128xf32> to vector<2x128xf32>
    %15 = arith.addf %12, %14 : vector<2x128xf32>
    %c0_14 = arith.constant 0 : index
    %c0_15 = arith.constant 0 : index
    %16 = vector.load %arg6[%c0_14, %c0_15] : memref<2x128xf32, #tpu.memory_space<vmem>>, vector<2x128xf32>
    tpu.vector_store %arg6[%c0_14, %c0_15], %15 {strides = array<i32>} : memref<2x128xf32, #tpu.memory_space<vmem>>, vector<2x128xf32>,
    return
  }
  func.func @transform_0(%arg0: i32) -> (i32, i32, i32) {
    %c0_i32 = arith.constant 0 : i32
    %c0_i32_0 = arith.constant 0 : i32
    %c0_i32_1 = arith.constant 0 : i32
    return %arg0, %c0_i32, %c0_i32_0 : i32, i32, i32
  }
  func.func @transform_1(%arg0: i32) -> (i32, i32) {
    %c0_i32 = arith.constant 0 : i32
    %c0_i32_0 = arith.constant 0 : i32
    %c0_i32_1 = arith.constant 0 : i32
    return %c0_i32, %c0_i32_0 : i32, i32
  }
  func.func @transform_2(%arg0: i32) -> (i32, i32) {
    %c0_i32 = arith.constant 0 : i32
    %c0_i32_0 = arith.constant 0 : i32
    %c0_i32_1 = arith.constant 0 : i32
    return %c0_i32, %c0_i32_0 : i32, i32
  }
  func.func @transform_3(%arg0: i32) -> (i32, i32) {
    %c0_i32 = arith.constant 0 : i32
    %c0_i32_0 = arith.constant 0 : i32
    %c0_i32_1 = arith.constant 0 : i32
    return %c0_i32, %c0_i32_0 : i32, i32
  }
  func.func @transform_4(%arg0: i32) -> (i32, i32) {
    %c0_i32 = arith.constant 0 : i32
    %c0_i32_0 = arith.constant 0 : i32
    %c0_i32_1 = arith.constant 0 : i32
    return %c0_i32, %c0_i32_0 : i32, i32
  }
  func.func @transform_5(%arg0: i32) -> (i32, i32) {
    %c0_i32 = arith.constant 0 : i32
    %c0_i32_0 = arith.constant 0 : i32
    return %arg0, %c0_i32 : i32, i32
  }
}

</mosaic_0001>

<llo_original>
// kernel: tpu_custom_call.1
$region0: #{tpu_custom_call.1}
  #allocation0 [shape = 'u32[]', space=smem, size = 0x4, offset = 0x4, fixed_abs, tag = 'smem constant byte address 0x4 - core index']
  #allocation1 [shape = 'u32[144,128]{1,0:T(1,128)}', space=vmem, size = 0x12000, scoped, tag = 'internal scratch']
  %s0 = inlined_call_operand.hbm [shape: f32[2,4,256], index: 0, kind: input, shape index: {}]
  %s1 = inlined_call_operand.hbm [shape: f32[4,256], index: 1, kind: input, shape index: {}]
  %s2 = inlined_call_operand.vmem [shape: f32[1,256], index: 2, kind: input, shape index: {}]
  %s3 = inlined_call_operand.hbm [shape: f32[256,128], index: 3, kind: input, shape index: {}]
  %s4 = inlined_call_operand.vmem [shape: f32[1,128], index: 4, kind: input, shape index: {}]
  %s5 = inlined_call_operand.hbm [shape: f32[2,128], index: 5, kind: output, shape index: {}]
  %s6 = sld [smem:[#allocation0]]
  $region42: #{tpu_custom_call.1} parent=0
    _
  %s8 = ssub.s32 1, %s6
  %s9 = scalar_select 0, %s8, %s6
  $region1: #{tpu_custom_call.1} parent=0
    #allocation2 [shape = 'u8[8192]{0}', space=vmem, size = 0x2000, scoped, tag = 'input window, operand 0, single buffered']
    #allocation3 [shape = 's32[1]{0}', space=sflag, size = 0x4, scoped, tag = 'scoped memory for tpu_custom_call.1']
    #allocation4 [shape = 's32[1]{0}', space=sflag, size = 0x4, scoped, tag = 'scoped memory for tpu_custom_call.1']
    #allocation5 [shape = 'u8[4096]{0}', space=vmem, size = 0x1000, scoped, tag = 'input window, operand 1, single buffered']
    #allocation6 [shape = 's32[1]{0}', space=sflag, size = 0x4, scoped, tag = 'scoped memory for tpu_custom_call.1']
    #allocation7 [shape = 'u8[131072]{0}', space=vmem, size = 0x20000, scoped, tag = 'input window, operand 3, single buffered']
    #allocation8 [shape = 'u8[1024]{0}', space=vmem, size = 0x400, scoped, tag = 'output window, operand 0, single buffered']
    %10 = vsyncpa [#allocation3], 0
    %11 = vsyncpa [#allocation6], 0
    %12 = vsyncpa [#allocation4], 0
    // Predicated region
    $region2: #{tpu_custom_call.1} parent=1 // pred_check
      _
    $region3: #{tpu_custom_call.1} parent=1 // pred_check_branch
      %14 = sbr.rel (0) target = $region5
    $region4: #{tpu_custom_call.1} parent=1 // pred_region
      %s16 = ssub.s32 256, 256
      %17 = vsyncadd [#allocation3], %s16
      %s18 = sshll.u32 [#allocation2], 4
      %s19 = int_to_ptr.vmem [resolvable:$true] %s18
      %24 = dma.hbm_to_vmem [thread:$0]  %s0, 256, %s19, [#allocation3], 128, 128, 8
    $region5: #{tpu_custom_call.1} parent=1 // pred_fallthru
      _
    // Predicated region
    $region6: #{tpu_custom_call.1} parent=1 // pred_check
      _
    $region7: #{tpu_custom_call.1} parent=1 // pred_check_branch
      %26 = sbr.rel (0) target = $region9
    $region8: #{tpu_custom_call.1} parent=1 // pred_region
      %s28 = ssub.s32 128, 128
      %29 = vsyncadd [#allocation6], %s28
      %s31 = sshll.u32 [#allocation5], 4
      %s32 = int_to_ptr.vmem [resolvable:$true] %s31
      %34 = dma.hbm_to_vmem [thread:$0]  %s1, 128, %s32, [#allocation6]
    $region9: #{tpu_custom_call.1} parent=1 // pred_fallthru
      _
    // Predicated region
    $region10: #{tpu_custom_call.1} parent=1 // pred_check
      _
    $region11: #{tpu_custom_call.1} parent=1 // pred_check_branch
      %36 = sbr.rel (0) target = $region13
    $region12: #{tpu_custom_call.1} parent=1 // pred_region
      _
    $region13: #{tpu_custom_call.1} parent=1 // pred_fallthru
      _
    // Predicated region
    $region14: #{tpu_custom_call.1} parent=1 // pred_check
      _
    $region15: #{tpu_custom_call.1} parent=1 // pred_check_branch
      %38 = sbr.rel (0) target = $region17
    $region16: #{tpu_custom_call.1} parent=1 // pred_region
      %s40 = ssub.s32 4096, 4096
      %41 = vsyncadd [#allocation6], %s40
      %s42 = sshll.u32 [#allocation7], 4
      %s43 = int_to_ptr.vmem [resolvable:$true] %s42
      %48 = dma.hbm_to_vmem [thread:$0]  %s3, 4096, %s43, [#allocation6], 128, 128, 8
    $region17: #{tpu_custom_call.1} parent=1 // pred_fallthru
      _
    // Predicated region
    $region18: #{tpu_custom_call.1} parent=1 // pred_check
      _
    $region19: #{tpu_custom_call.1} parent=1 // pred_check_branch
      %50 = sbr.rel (0) target = $region21
    $region20: #{tpu_custom_call.1} parent=1 // pred_region
      _
    $region21: #{tpu_custom_call.1} parent=1 // pred_fallthru
      _
    // Predicated region
    $region22: #{tpu_custom_call.1} parent=1 // pred_check
      _
    $region23: #{tpu_custom_call.1} parent=1 // pred_check_branch
      %52 = sbr.rel (0) target = $region25
    $region24: #{tpu_custom_call.1} parent=1 // pred_region
      %53 = dma.done [#allocation3], 256
    $region25: #{tpu_custom_call.1} parent=1 // pred_fallthru
      _
    // Predicated region
    $region26: #{tpu_custom_call.1} parent=1 // pred_check
      _
    $region27: #{tpu_custom_call.1} parent=1 // pred_check_branch
      %55 = sbr.rel (0) target = $region29
    $region28: #{tpu_custom_call.1} parent=1 // pred_region
      %56 = dma.done [#allocation6], 128
    $region29: #{tpu_custom_call.1} parent=1 // pred_fallthru
      _
    // Predicated region
    $region30: #{tpu_custom_call.1} parent=1 // pred_check
      _
    $region31: #{tpu_custom_call.1} parent=1 // pred_check_branch
      %58 = sbr.rel (0) target = $region33
    $region32: #{tpu_custom_call.1} parent=1 // pred_region
      %59 = dma.done [#allocation6], 4096
    $region33: #{tpu_custom_call.1} parent=1 // pred_fallthru
      _
    %v60 = vld [vmem:[#allocation2] sm:$0xff]
    %v61 = vld [vmem:[#allocation2 + $0x8] sm:$0xff]
    %v64 = vcombine.high %v60, %v60
    %v65 = vcombine.high %v61, %v61
    %vm68 = vcmask 1043456
    %v69 = vsel %vm68, %v60, 0.0
    %v70 = vsel %vm68, %v64, 0.0
    %v71 = vadd.f32 %v69, %v70
    %72 = vadd.xlane.f32.xlu0 %v71
    %v73 = vpop.xlane.xlu0 %72
    %v74 = vsel %vm68, %v61, 0.0
    %v75 = vsel %vm68, %v65, 0.0
    %v76 = vadd.f32 %v74, %v75
    %77 = vadd.xlane.f32.xlu0 %v76
    %v78 = vpop.xlane.xlu0 %77
    %v79 = vmul.f32 %v73, 0.00390625
    %v80 = vmul.f32 %v78, 0.00390625
    %v81 = vld [vmem:[#allocation5] sm:$0xff]
    %v82 = vld [vmem:[%s2] sm:$0x3]
    %v84 = vlaneseq
    %v85 = vshrl.u32 %v84, 7
    %v86 = vsub.s32 0, %v85
    %v87 = vrot.slane %v82, %v86
    %v88 = vlaneseq
    %v89 = vshrl.u32 %v88, 7
    %v90 = vsub.s32 1, %v89
    %v91 = vrot.slane %v82, %v90
    %v96 = vlaneseq
    %v97 = vand.u32 %v96, 127
    %v98 = vlaneseq
    %v99 = vshrl.u32 %v98, 7
    %v100 = vsub.s32 %v97, %v99
    %v101 = vrot.slane %v79, %v100
    %v102 = vlaneseq
    %v103 = vshrl.u32 %v102, 7
    %v104 = vsub.s32 %v97, %v103
    %v105 = vrot.slane %v80, %v104
    %vm106 = vcmask 1041409
    %v107 = vsel %vm106, %v105, %v101
    %v109 = vcombine.high %v81, %v81
    %vm110 = vcmask 31744
    %v111 = vsel %vm110, %v107, 0
    %v113 = vsel %vm68, %v81, 0
    %v115 = vsel %vm68, %v109, 0
    %117 = vmatprep.subr.mxu0 0.0
    %118 = vmatpush1.msra.mxu0 0.0
    %119 = vmatprep.subr.mxu0 0.0
    %120 = vmatpush1.msra.mxu0 0.0
    %121 = vmatprep.subr.mxu0 0.0
    %122 = vmatpush1.msra.mxu0 0.0
    %123 = vmatprep.subr.mxu0 0.0
    %124 = vmatpush1.msra.mxu0 0.0
    %125 = vmatprep.subr.mxu0 0.0
    %126 = vmatpush1.msra.mxu0 0.0
    %127 = vmatprep.subr.mxu0 0.0
    %128 = vmatpush1.msra.mxu0 0.0
    %129 = vmatprep.subr.mxu0 0.0
    %130 = vmatpush1.msra.mxu0 0.0
    %131 = vmatprep.subr.mxu0 0.0
    %132 = vmatpush1.msra.mxu0 0.0
    %133 = vmatprep.subr.mxu0 0.0
    %134 = vmatpush1.msra.mxu0 0.0
    %135 = vmatprep.subr.mxu0 0.0
    %136 = vmatpush1.msra.mxu0 0.0
    %137 = vmatprep.subr.mxu0 0.0
    %138 = vmatpush1.msra.mxu0 0.0
    %139 = vmatprep.subr.mxu0 0.0
    %140 = vmatpush1.msra.mxu0 0.0
    %141 = vmatprep.subr.mxu0 0.0
    %142 = vmatpush1.msra.mxu0 0.0
    %143 = vmatprep.subr.mxu0 0.0
    %144 = vmatpush1.msra.mxu0 0.0
    %145 = vmatprep.subr.mxu0 0.0
    %146 = vmatpush1.msra.mxu0 0.0
    %147 = vmatprep.subr.mxu0 %v115
    %148 = vmatpush1.msra.mxu0 %v113
    %149 = vmatprep.subr.mxu0 0.0
    %150 = vmatpush2.msra.mxu0 0.0
    %151 = vmatprep.subr.mxu0 0.0
    %152 = vmatpush2.msra.mxu0 0.0
    %153 = vmatprep.subr.mxu0 0.0
    %154 = vmatpush2.msra.mxu0 0.0
    %155 = vmatprep.subr.mxu0 0.0
    %156 = vmatpush2.msra.mxu0 0.0
    %157 = vmatprep.subr.mxu0 0.0
    %158 = vmatpush2.msra.mxu0 0.0
    %159 = vmatprep.subr.mxu0 0.0
    %160 = vmatpush2.msra.mxu0 0.0
    %161 = vmatprep.subr.mxu0 0.0
    %162 = vmatpush2.msra.mxu0 0.0
    %163 = vmatprep.subr.mxu0 0.0
    %164 = vmatpush2.msra.mxu0 0.0
    %165 = vmatprep.subr.mxu0 0.0
    %166 = vmatpush2.msra.mxu0 0.0
    %167 = vmatprep.subr.mxu0 0.0
    %168 = vmatpush2.msra.mxu0 0.0
    %169 = vmatprep.subr.mxu0 0.0
    %170 = vmatpush2.msra.mxu0 0.0
    %171 = vmatprep.subr.mxu0 0.0
    %172 = vmatpush2.msra.mxu0 0.0
    %173 = vmatprep.subr.mxu0 0.0
    %174 = vmatpush2.msra.mxu0 0.0
    %175 = vmatprep.subr.mxu0 0.0
    %176 = vmatpush2.msra.mxu0 0.0
    %177 = vmatprep.subr.mxu0 0.0
    %178 = vmatpush2.msra.mxu0 0.0
    %179 = vmatprep.subr.mxu0 0.0
    %180 = vmatpush2.msra.mxu0 0.0
    %181 = vmatprep.mubr.f32.mxu0 0.0
    %182 = vmatmul.mubr.f32.gmra.mxu0 %v111
    %v183 = vpop.f32.mrf.mxu0
    %v184 = vadd.f32 %v87, %v183
    %v185 = vpop.f32.mrf.mxu0
    %v186 = vadd.f32 %v91, %v185
    %187 = vdwg.mxu0
    %v188 = vmax.f32 %v184, 0.0
    %v189 = vmax.f32 %v186, 0.0
    %v190 = vld [vmem:[#allocation7] sm:$0xff]
    %v191 = vld [vmem:[#allocation7 + $0x8] sm:$0xff]
    %v192 = vld [vmem:[#allocation7 + $0x10] sm:$0xff]
    %v193 = vld [vmem:[#allocation7 + $0x18] sm:$0xff]
    %v194 = vld [vmem:[#allocation7 + $0x20] sm:$0xff]
    %v195 = vld [vmem:[#allocation7 + $0x28] sm:$0xff]
    %v196 = vld [vmem:[#allocation7 + $0x30] sm:$0xff]
    %v197 = vld [vmem:[#allocation7 + $0x38] sm:$0xff]
    %v198 = vld [vmem:[#allocation7 + $0x40] sm:$0xff]
    %v199 = vld [vmem:[#allocation7 + $0x48] sm:$0xff]
    %v200 = vld [vmem:[#allocation7 + $0x50] sm:$0xff]
    %v201 = vld [vmem:[#allocation7 + $0x58] sm:$0xff]
    %v202 = vld [vmem:[#allocation7 + $0x60] sm:$0xff]
    %v203 = vld [vmem:[#allocation7 + $0x68] sm:$0xff]
    %v204 = vld [vmem:[#allocation7 + $0x70] sm:$0xff]
    %v205 = vld [vmem:[#allocation7 + $0x78] sm:$0xff]
    %v206 = vld [vmem:[#allocation7 + $0x80] sm:$0xff]
    %v207 = vld [vmem:[#allocation7 + $0x88] sm:$0xff]
    %v208 = vld [vmem:[#allocation7 + $0x90] sm:$0xff]
    %v209 = vld [vmem:[#allocation7 + $0x98] sm:$0xff]
    %v210 = vld [vmem:[#allocation7 + $0xa0] sm:$0xff]
    %v211 = vld [vmem:[#allocation7 + $0xa8] sm:$0xff]
    %v212 = vld [vmem:[#allocation7 + $0xb0] sm:$0xff]
    %v213 = vld [vmem:[#allocation7 + $0xb8] sm:$0xff]
    %v214 = vld [vmem:[#allocation7 + $0xc0] sm:$0xff]
    %v215 = vld [vmem:[#allocation7 + $0xc8] sm:$0xff]
    %v216 = vld [vmem:[#allocation7 + $0xd0] sm:$0xff]
    %v217 = vld [vmem:[#allocation7 + $0xd8] sm:$0xff]
    %v218 = vld [vmem:[#allocation7 + $0xe0] sm:$0xff]
    %v219 = vld [vmem:[#allocation7 + $0xe8] sm:$0xff]
    %v220 = vld [vmem:[#allocation7 + $0xf0] sm:$0xff]
    %v221 = vld [vmem:[#allocation7 + $0xf8] sm:$0xff]
    %v222 = vld [vmem:[%s4] sm:$0x1]
    %v224 = vlaneseq
    %v225 = vshrl.u32 %v224, 7
    %v226 = vsub.s32 0, %v225
    %v227 = vrot.slane %v222, %v226
    %229 = vmatprep.subr.mxu0 0.0
    %230 = vmatpush1.msra.mxu0 %v205
    %231 = vmatprep.subr.mxu0 0.0
    %232 = vmatpush1.msra.mxu0 %v204
    %233 = vmatprep.subr.mxu0 0.0
    %234 = vmatpush1.msra.mxu0 %v203
    %235 = vmatprep.subr.mxu0 0.0
    %236 = vmatpush1.msra.mxu0 %v202
    %237 = vmatprep.subr.mxu0 0.0
    %238 = vmatpush1.msra.mxu0 %v201
    %239 = vmatprep.subr.mxu0 0.0
    %240 = vmatpush1.msra.mxu0 %v200
    %241 = vmatprep.subr.mxu0 0.0
    %242 = vmatpush1.msra.mxu0 %v199
    %243 = vmatprep.subr.mxu0 0.0
    %244 = vmatpush1.msra.mxu0 %v198
    %245 = vmatprep.subr.mxu0 0.0
    %246 = vmatpush1.msra.mxu0 %v197
    %247 = vmatprep.subr.mxu0 0.0
    %248 = vmatpush1.msra.mxu0 %v196
    %249 = vmatprep.subr.mxu0 0.0
    %250 = vmatpush1.msra.mxu0 %v195
    %251 = vmatprep.subr.mxu0 0.0
    %252 = vmatpush1.msra.mxu0 %v194
    %253 = vmatprep.subr.mxu0 0.0
    %254 = vmatpush1.msra.mxu0 %v193
    %255 = vmatprep.subr.mxu0 0.0
    %256 = vmatpush1.msra.mxu0 %v192
    %257 = vmatprep.subr.mxu0 0.0
    %258 = vmatpush1.msra.mxu0 %v191
    %259 = vmatprep.subr.mxu0 0.0
    %260 = vmatpush1.msra.mxu0 %v190
    %261 = vmatprep.subr.mxu0 0.0
    %262 = vmatpush2.msra.mxu0 %v221
    %263 = vmatprep.subr.mxu0 0.0
    %264 = vmatpush2.msra.mxu0 %v220
    %265 = vmatprep.subr.mxu0 0.0
    %266 = vmatpush2.msra.mxu0 %v219
    %267 = vmatprep.subr.mxu0 0.0
    %268 = vmatpush2.msra.mxu0 %v218
    %269 = vmatprep.subr.mxu0 0.0
    %270 = vmatpush2.msra.mxu0 %v217
    %271 = vmatprep.subr.mxu0 0.0
    %272 = vmatpush2.msra.mxu0 %v216
    %273 = vmatprep.subr.mxu0 0.0
    %274 = vmatpush2.msra.mxu0 %v215
    %275 = vmatprep.subr.mxu0 0.0
    %276 = vmatpush2.msra.mxu0 %v214
    %277 = vmatprep.subr.mxu0 0.0
    %278 = vmatpush2.msra.mxu0 %v213
    %279 = vmatprep.subr.mxu0 0.0
    %280 = vmatpush2.msra.mxu0 %v212
    %281 = vmatprep.subr.mxu0 0.0
    %282 = vmatpush2.msra.mxu0 %v211
    %283 = vmatprep.subr.mxu0 0.0
    %284 = vmatpush2.msra.mxu0 %v210
    %285 = vmatprep.subr.mxu0 0.0
    %286 = vmatpush2.msra.mxu0 %v209
    %287 = vmatprep.subr.mxu0 0.0
    %288 = vmatpush2.msra.mxu0 %v208
    %289 = vmatprep.subr.mxu0 0.0
    %290 = vmatpush2.msra.mxu0 %v207
    %291 = vmatprep.subr.mxu0 0.0
    %292 = vmatpush2.msra.mxu0 %v206
    %293 = vmatprep.mubr.f32.mxu0 %v189
    %294 = vmatmul.mubr.f32.gmra.mxu0 %v188
    %v295 = vpop.f32.mrf.mxu0
    %v296 = vadd.f32 %v227, %v295
    %v297 = vpop.f32.mrf.mxu0
    %298 = vdwg.mxu0
    %299 = vst [vmem:[#allocation8] sm:$0x3] %v296
    // Predicated region
    $region34: #{tpu_custom_call.1} parent=1 // pred_check
      _
    $region35: #{tpu_custom_call.1} parent=1 // pred_check_branch
      %301 = sbr.rel (0) target = $region37
    $region36: #{tpu_custom_call.1} parent=1 // pred_region
      %s303 = ssub.s32 32, 32
      %304 = vsyncadd [#allocation4], %s303
      %s306 = sshll.u32 [#allocation8], 4
      %s307 = int_to_ptr.vmem [resolvable:$true] %s306
      %309 = dma.vmem_to_hbm [thread:$0]  %s307, 32, %s5, [#allocation4]
    $region37: #{tpu_custom_call.1} parent=1 // pred_fallthru
      _
    // Predicated region
    $region38: #{tpu_custom_call.1} parent=1 // pred_check
      _
    $region39: #{tpu_custom_call.1} parent=1 // pred_check_branch
      %311 = sbr.rel (0) target = $region41
    $region40: #{tpu_custom_call.1} parent=1 // pred_region
      %312 = dma.done [#allocation4], 32
    $region41: #{tpu_custom_call.1} parent=1 // pred_fallthru
      _
    %313 = vsyncpa [#allocation3], 1
    %314 = vsyncpa [#allocation6], 1
    %315 = vsyncpa [#allocation4], 1

</llo_original>
